<compile_context>
chip_gen: v5e
topology: v5e:2x2
jax: 0.10.0
libtpu: 0.0.40
codegen_flags: <defaults>
</compile_context>

<pallas_src>
import functools

import jax
import jax.numpy as jnp
from jax.experimental import pallas as pl
from jax.experimental.pallas import tpu as pltpu

# TODO(synk): ActFun.apply is a custom surrogate-gradient spike function not
# shown in the source; its standard SNN forward is a Heaviside step at
# threshold 0.5 on the sigmoid output (input.gt(0.5).float()), which is what we
# implement here (equivalently: pre-sigmoid y > 0).
SPIKE_THRESH = 0.5


def _autoencoder_kernel(x_ref, w1_ref, b1_ref, w2_ref, b2c_ref, o_ref, *,
                        spike_output: bool):
    # x_ref : (1, TN)       flattened input tile
    # w1_ref: (step, 1)     fc1 weight (out_features=step, in_features=1)
    # b1_ref: (step, 1)     fc1 bias
    # w2_ref: (step, step)  fc2 weight (out, in)
    # b2c_ref:(step, 1)     spike path: -b2 (threshold);  analog path: +b2
    # o_ref : (step, TN)    output tile (already "transposed" layout)
    #
    # NOTE: x could also be replicated across sublanes with a stride-0 load
    # (x_ref[pl.ds(0, step, stride=0), :]); neutral while HBM-bound, so the
    # implicit broadcast is kept for simplicity.
    x = x_ref[...]                                           # (1, TN)

    # fc1 + ReLU, computed directly in transposed layout:
    #   hT[s, n] = relu(w1[s] * x[n] + b1[s])
    h = jnp.maximum(w1_ref[...] * x + b1_ref[...], 0.0)      # (step, TN)

    # fc2 in transposed layout on the MXU: zT = W2 @ hT
    # (for strict PyTorch bit-parity near the spike threshold, add
    #  precision=jax.lax.Precision.HIGHEST — free, kernel is memory-bound)
    z = jnp.dot(w2_ref[...], h, preferred_element_type=jnp.float32)

    if spike_output:
        # sigmoid(z + b2) > 0.5  <=>  z + b2 > 0  <=>  z > -b2  (= b2c here).
        # Skips both the EUP sigmoid and the +b2 VALU pass.
        o_ref[...] = jnp.where(z > b2c_ref[...],
                               jnp.float32(1.0),
                               jnp.float32(0.0)).astype(o_ref.dtype)
    else:
        o_ref[...] = jax.nn.sigmoid(z + b2c_ref[...]).astype(o_ref.dtype)


def _pick_tile_n(n: int, tile_n_max: int) -> int:
    """Large lane-dense tiles; keep an even block count (>=2) for megacore."""
    cap = max(128, (tile_n_max // 128) * 128)
    if n <= 512:
        return n                               # single block == full dim
    blocks = max(2, pl.cdiv(n, cap))
    if blocks % 2:
        blocks += 1                            # even split across 2 TCs (v7x)
    tn = ((pl.cdiv(n, blocks) + 127) // 128) * 128   # lane-dense (128-multiple)
    return max(128, min(cap, tn))


def autoencoder_forward(x, w1, b1, w2, b2, *, spike_output=True,
                        tile_n=131072, out_dtype=None):
    """Pallas implementation of AutoEncoder.forward.

    x : arbitrary-shape float32 array (e.g. NCHW image batch)
    w1: (step, 1)    b1: (step,)
    w2: (step, step) b2: (step,)
    returns: (step, *x.shape).
      spike_output=True  -> bf16 by default (spikes are exactly 0/1 in bf16)
      spike_output=False -> f32 by default (matches PyTorch within 1e-5)
    """
    step = w1.shape[0]
    orig_shape = x.shape
    n = int(x.size)

    if out_dtype is None:
        out_dtype = jnp.bfloat16 if spike_output else jnp.float32

    x_flat = x.reshape(1, n).astype(jnp.float32)

    b1c = b1.reshape(step, 1).astype(jnp.float32)
    b2f = b2.reshape(step, 1).astype(jnp.float32)
    # Spike path: fold the bias into the comparison threshold (z > -b2).
    b2c = (-b2f) if spike_output else b2f
    w1c = w1.astype(jnp.float32)
    w2c = w2.astype(jnp.float32)

    tn = _pick_tile_n(n, tile_n)
    grid = (pl.cdiv(n, tn),)

    out_bytes = jnp.dtype(out_dtype).itemsize
    cost = pl.CostEstimate(
        flops=2 * step * step * n + 5 * step * n,
        transcendentals=0 if spike_output else step * n,
        bytes_accessed=4 * n + out_bytes * step * n + 4 * (step * step + 3 * step),
    )

    out = pl.pallas_call(
        functools.partial(_autoencoder_kernel, spike_output=spike_output),
        out_shape=jax.ShapeDtypeStruct((step, n), out_dtype),
        grid_spec=pltpu.PrefetchScalarGridSpec(
            num_scalar_prefetch=0,
            grid=grid,
            in_specs=[
                pl.BlockSpec((1, tn), lambda i: (0, i)),          # x tile
                pl.BlockSpec((step, 1), lambda i: (0, 0)),        # w1 (resident)
                pl.BlockSpec((step, 1), lambda i: (0, 0)),        # b1 (resident)
                pl.BlockSpec((step, step), lambda i: (0, 0)),     # w2 (resident)
                pl.BlockSpec((step, 1), lambda i: (0, 0)),        # -b2 / b2
            ],
            out_specs=pl.BlockSpec((step, tn), lambda i: (0, i)),
        ),
        compiler_params=pltpu.CompilerParams(
            dimension_semantics=("parallel",),
            # ~136*tn bytes worst case (f32 out): tn=131072 ~= 18 MiB; 48 MiB
            # leaves headroom on every generation (v7x physical VMEM = 64 MiB).
            vmem_limit_bytes=48 * 1024 * 1024),
        cost_estimate=cost,
    )(x_flat, w1c, b1c, w2c, b2c)

    return out.reshape((step,) + tuple(orig_shape))


def _reference_forward(x, w1, b1, w2, b2, spike_output=True):
    """Pure-JAX reference mirroring the PyTorch code."""
    shape = x.shape
    xf = x.reshape(-1, 1)
    h = jnp.maximum(xf @ w1.T + b1, 0.0)           # fc1 + relu
    y = (h @ w2.T + b2).T                          # fc2 + transpose
    s = jax.nn.sigmoid(y)
    if spike_output:
        s = (s > SPIKE_THRESH).astype(jnp.float32)
    return s.reshape((w1.shape[0],) + tuple(shape))


if __name__ == "__main__":
    step = 8
    key = jax.random.PRNGKey(0)
    k_x, k_w1, k_b1, k_w2, k_b2 = jax.random.split(key, 5)

    # Deterministic synthetic parameters (shapes from nn.Linear in __init__).
    w1 = jax.random.uniform(k_w1, (step, 1), jnp.float32, -1.0, 1.0)
    b1 = jax.random.uniform(k_b1, (step,), jnp.float32, -1.0, 1.0)
    bound2 = 1.0 / (step ** 0.5)
    w2 = jax.random.uniform(k_w2, (step, step), jnp.float32, -bound2, bound2)
    b2 = jax.random.uniform(k_b2, (step,), jnp.float32, -bound2, bound2)

    # Small NCHW-style input.
    x = jax.random.normal(k_x, (2, 4, 16, 16), jnp.float32)

    # Spike path (bf16 output: spikes are exactly 0/1).
    out = autoencoder_forward(x, w1, b1, w2, b2, spike_output=True)
    out = jax.block_until_ready(out)
    ref = _reference_forward(x, w1, b1, w2, b2, spike_output=True)
    assert out.shape == (step, 2, 4, 16, 16), out.shape
    assert out.dtype == jnp.bfloat16, out.dtype
    assert jnp.allclose(out.astype(jnp.float32), ref, atol=1e-5), \
        "spike mismatch vs reference"

    # Analog (non-spike) path stays f32.
    out_a = autoencoder_forward(x, w1, b1, w2, b2, spike_output=False)
    out_a = jax.block_until_ready(out_a)
    ref_a = _reference_forward(x, w1, b1, w2, b2, spike_output=False)
    assert out_a.dtype == jnp.float32, out_a.dtype
    assert jnp.allclose(out_a, ref_a, atol=1e-5), "analog mismatch vs reference"

    print("KERNEL_OK")
</pallas_src>

<mosaic_0001>
module attributes {stable_mosaic.version = 11 : i64} {
  func.func @_autoencoder_kernel(%arg0: i32, %arg1: memref<1x1024xf32, #tpu.memory_space<vmem>>, %arg2: memref<8x1xf32, #tpu.memory_space<vmem>>, %arg3: memref<8x1xf32, #tpu.memory_space<vmem>>, %arg4: memref<8x8xf32, #tpu.memory_space<vmem>>, %arg5: memref<8x1xf32, #tpu.memory_space<vmem>>, %arg6: memref<8x1024xbf16, #tpu.memory_space<vmem>>) attributes {dimension_semantics = [#tpu.dimension_semantics<parallel>], iteration_bounds = array<i64: 2>, scalar_prefetch = 0 : i64, scratch_operands = 0 : i64, tpu.core_type = #tpu.core_type<tc>, window_params = [{transform_indices = @transform_0, window_bounds = array<i64: 1, 1024>}, {pipeline_mode = #tpu.pipeline_mode<synchronous>, transform_indices = @transform_1, window_bounds = array<i64: 8, 1>}, {pipeline_mode = #tpu.pipeline_mode<synchronous>, transform_indices = @transform_2, window_bounds = array<i64: 8, 1>}, {pipeline_mode = #tpu.pipeline_mode<synchronous>, transform_indices = @transform_3, window_bounds = array<i64: 8, 8>}, {pipeline_mode = #tpu.pipeline_mode<synchronous>, transform_indices = @transform_4, window_bounds = array<i64: 8, 1>}, {transform_indices = @transform_5, window_bounds = array<i64: 8, 1024>}]} {
    %c0 = arith.constant 0 : index
    %c0_0 = arith.constant 0 : index
    %0 = vector.load %arg1[%c0, %c0_0] : memref<1x1024xf32, #tpu.memory_space<vmem>>, vector<1x1024xf32>
    %c0_1 = arith.constant 0 : index
    %c0_2 = arith.constant 0 : index
    %1 = vector.load %arg2[%c0_1, %c0_2] : memref<8x1xf32, #tpu.memory_space<vmem>>, vector<8x1xf32>
    %2 = vector.broadcast %1 : vector<8x1xf32> to vector<8x1024xf32>
    %3 = vector.broadcast %0 : vector<1x1024xf32> to vector<8x1024xf32>
    %4 = arith.mulf %2, %3 : vector<8x1024xf32>
    %c0_3 = arith.constant 0 : index
    %c0_4 = arith.constant 0 : index
    %5 = vector.load %arg3[%c0_3, %c0_4] : memref<8x1xf32, #tpu.memory_space<vmem>>, vector<8x1xf32>
    %6 = vector.broadcast %5 : vector<8x1xf32> to vector<8x1024xf32>
    %7 = arith.addf %4, %6 : vector<8x1024xf32>
    %cst = arith.constant 0.000000e+00 : f32
    %8 = vector.broadcast %cst : f32 to vector<8x1024xf32>
    %9 = arith.maximumf %7, %8 : vector<8x1024xf32>
    %c0_5 = arith.constant 0 : index
    %c0_6 = arith.constant 0 : index
    %10 = vector.load %arg4[%c0_5, %c0_6] : memref<8x8xf32, #tpu.memory_space<vmem>>, vector<8x8xf32>
    %cst_7 = arith.constant dense<0.000000e+00> : vector<8x1024xf32>
    %11 = tpu.matmul %10, %9, %cst_7 {dimension_numbers = #tpu.dot_dimension_numbers<[1], [0], [0], [1], [0, 0, 1, 1], [], []>} : vector<8x8xf32>, vector<8x1024xf32>, vector<8x1024xf32> -> vector<8x1024xf32>
    %c0_8 = arith.constant 0 : index
    %c0_9 = arith.constant 0 : index
    %12 = vector.load %arg5[%c0_8, %c0_9] : memref<8x1xf32, #tpu.memory_space<vmem>>, vector<8x1xf32>
    %13 = vector.broadcast %12 : vector<8x1xf32> to vector<8x1024xf32>
    %14 = arith.cmpf ogt, %11, %13 : vector<8x1024xf32>
    %cst_10 = arith.constant 1.000000e+00 : f32
    %cst_11 = arith.constant 0.000000e+00 : f32
    %15 = vector.broadcast %cst_10 : f32 to vector<8x1024xf32>
    %16 = vector.broadcast %cst_11 : f32 to vector<8x1024xf32>
    %17 = arith.select %14, %15, %16 : vector<8x1024xi1>, vector<8x1024xf32>
    %18 = arith.truncf %17 : vector<8x1024xf32> to vector<8x1024xbf16>
    %c0_12 = arith.constant 0 : index
    %c0_13 = arith.constant 0 : index
    %19 = vector.load %arg6[%c0_12, %c0_13] : memref<8x1024xbf16, #tpu.memory_space<vmem>>, vector<8x1024xbf16>
    tpu.vector_store %arg6[%c0_12, %c0_13], %18 {strides = array<i32>} : memref<8x1024xbf16, #tpu.memory_space<vmem>>, vector<8x1024xbf16>,
    return
  }
  func.func @transform_0(%arg0: i32) -> (i32, i32) {
    %c0_i32 = arith.constant 0 : i32
    %c0_i32_0 = arith.constant 0 : i32
    return %c0_i32, %arg0 : i32, i32
  }
  func.func @transform_1(%arg0: i32) -> (i32, i32) {
    %c0_i32 = arith.constant 0 : i32
    %c0_i32_0 = arith.constant 0 : i32
    %c0_i32_1 = arith.constant 0 : i32
    return %c0_i32, %c0_i32_0 : i32, i32
  }
  func.func @transform_2(%arg0: i32) -> (i32, i32) {
    %c0_i32 = arith.constant 0 : i32
    %c0_i32_0 = arith.constant 0 : i32
    %c0_i32_1 = arith.constant 0 : i32
    return %c0_i32, %c0_i32_0 : i32, i32
  }
  func.func @transform_3(%arg0: i32) -> (i32, i32) {
    %c0_i32 = arith.constant 0 : i32
    %c0_i32_0 = arith.constant 0 : i32
    %c0_i32_1 = arith.constant 0 : i32
    return %c0_i32, %c0_i32_0 : i32, i32
  }
  func.func @transform_4(%arg0: i32) -> (i32, i32) {
    %c0_i32 = arith.constant 0 : i32
    %c0_i32_0 = arith.constant 0 : i32
    %c0_i32_1 = arith.constant 0 : i32
    return %c0_i32, %c0_i32_0 : i32, i32
  }
  func.func @transform_5(%arg0: i32) -> (i32, i32) {
    %c0_i32 = arith.constant 0 : i32
    %c0_i32_0 = arith.constant 0 : i32
    return %c0_i32, %arg0 : i32, i32
  }
}

</mosaic_0001>

<llo_original>
// kernel: tpu_custom_call.1
$region0: #{tpu_custom_call.1}
  #allocation0 [shape = 'u32[]', space=smem, size = 0x4, offset = 0x4, fixed_abs, tag = 'smem constant byte address 0x4 - core index']
  #allocation1 [shape = 'u32[72,128]{1,0:T(1,128)}', space=vmem, size = 0x9000, scoped, tag = 'internal scratch']
  %s0 = inlined_call_operand.vmem [shape: f32[1,2048], index: 0, kind: input, shape index: {}]
  %s1 = inlined_call_operand.vmem [shape: f32[8,1], index: 1, kind: input, shape index: {}]
  %s2 = inlined_call_operand.vmem [shape: f32[8,1], index: 2, kind: input, shape index: {}]
  %s3 = inlined_call_operand.vmem [shape: f32[8,8], index: 3, kind: input, shape index: {}]
  %s4 = inlined_call_operand.vmem [shape: f32[8,1], index: 4, kind: input, shape index: {}]
  %s5 = inlined_call_operand.hbm [shape: bf16[8,2048], index: 5, kind: output, shape index: {}]
  %s6 = sld [smem:[#allocation0]]
  $region53: #{tpu_custom_call.1} parent=0
    _
  %s8 = ssub.s32 1, %s6
  %s9 = scalar_select 0, %s8, %s6
  $region1: #{tpu_custom_call.1} parent=0
    #allocation2 [shape = 'u8[32768]{0}', space=vmem, size = 0x8000, scoped, tag = 'output window, operand 0']
    #allocation3 [shape = 's32[2]{0}', space=sflag, size = 0x8, scoped, tag = 'scoped memory for tpu_custom_call.1']
    %10 = vsyncpa [#allocation3], 0
    %s11 = scalar_lea.sflag [#allocation3], 1
    %12 = vsyncpa %s11, 0
    loop: start=0, step=1, limit=4
    $region2: #{tpu_custom_call.1} parent=1 // loop_pre_header
      _
    $region3: #{tpu_custom_call.1} parent=1 // loop_header
      %s14 = sphi 0, %s18
      %p15 = scmp.ge.s32.totalorder %s14, 4
      %s24 = sphi 0, %s26
      %s27 = sphi 0, %s24
      %s28 = sphi 0, %s27
      %s44 = sphi 0, %s28
      %s48 = sphi 0, %s48
      %s50 = sphi 0, %s48
      %s51 = sphi 0, %s50
      %s65 = sphi 0, %s51
      %s69 = sphi 0, %s69
      %s71 = sphi 0, %s69
      %s72 = sphi 0, %s71
      %s86 = sphi 0, %s72
      %s90 = sphi 0, %s90
      %s92 = sphi 0, %s90
      %s93 = sphi 0, %s92
      %s107 = sphi 0, %s93
      %s111 = sphi 0, %s111
      %s113 = sphi 0, %s111
      %s114 = sphi 0, %s113
      %s128 = sphi 0, %s114
      %s134 = sphi 0, %s136
      %s137 = sphi 0, %s134
      %s138 = sphi 0, %s137
      %s154 = sphi 0, %s138
    $region4: #{tpu_custom_call.1} parent=1 // loop_header_branch
      %17 = sbr.rel (%p15) target = $region8
    $region5: #{tpu_custom_call.1} parent=1 // loop_body
      %s19 = ssub.s32 %s14, 1
      %s20 = ssub.s32 %s14, 2
      %s21 = sadd.s32 %s14, 1
      %s22 = ssub.s32 %s14, %s21
      %p23 = scmp.eq.s32.totalorder %s22, 0
      %s25 = sadd.s32 %s24, 1
      %s26 = scalar_select %p23, %s24, %s25
      %p29 = pneg %p23
      %p30 = scmp.eq.s32.totalorder %s14, 1
      %p31 = por %p29, %p30
      %p32 = scmp.ne.s32.totalorder %s24, %s27
      %p33 = scmp.eq.s32.totalorder %s14, 0
      %p34 = por %p32, %p33
      %p35 = scmp.ne.s32.totalorder %s24, %s27
      %p36 = scmp.eq.s32.totalorder %s19, 1
      %p37 = por %p35, %p36
      %p38 = scmp.ne.s32.totalorder %s27, %s28
      %p39 = scmp.eq.s32.totalorder %s19, 0
      %p40 = por %p38, %p39
      %p41 = scmp.ne.s32.totalorder %s27, %s28
      %p42 = scmp.eq.s32.totalorder %s20, 1
      %p43 = por %p41, %p42
      %p45 = scmp.ne.s32.totalorder %s28, %s44
      %p46 = scmp.eq.s32.totalorder %s20, 0
      %p47 = por %p45, %p46
      %s49 = sadd.s32 %s48, 1
      %p52 = scmp.eq.s32.totalorder %s14, 1
      %p53 = scmp.ne.s32.totalorder %s48, %s50
      %p54 = scmp.eq.s32.totalorder %s14, 0
      %p55 = por %p53, %p54
      %p56 = scmp.ne.s32.totalorder %s48, %s50
      %p57 = scmp.eq.s32.totalorder %s19, 1
      %p58 = por %p56, %p57
      %p59 = scmp.ne.s32.totalorder %s50, %s51
      %p60 = scmp.eq.s32.totalorder %s19, 0
      %p61 = por %p59, %p60
      %p62 = scmp.ne.s32.totalorder %s50, %s51
      %p63 = scmp.eq.s32.totalorder %s20, 1
      %p64 = por %p62, %p63
      %p66 = scmp.ne.s32.totalorder %s51, %s65
      %p67 = scmp.eq.s32.totalorder %s20, 0
      %p68 = por %p66, %p67
      %s70 = sadd.s32 %s69, 1
      %p73 = scmp.eq.s32.totalorder %s14, 1
      %p74 = scmp.ne.s32.totalorder %s69, %s71
      %p75 = scmp.eq.s32.totalorder %s14, 0
      %p76 = por %p74, %p75
      %p77 = scmp.ne.s32.totalorder %s69, %s71
      %p78 = scmp.eq.s32.totalorder %s19, 1
      %p79 = por %p77, %p78
      %p80 = scmp.ne.s32.totalorder %s71, %s72
      %p81 = scmp.eq.s32.totalorder %s19, 0
      %p82 = por %p80, %p81
      %p83 = scmp.ne.s32.totalorder %s71, %s72
      %p84 = scmp.eq.s32.totalorder %s20, 1
      %p85 = por %p83, %p84
      %p87 = scmp.ne.s32.totalorder %s72, %s86
      %p88 = scmp.eq.s32.totalorder %s20, 0
      %p89 = por %p87, %p88
      %s91 = sadd.s32 %s90, 1
      %p94 = scmp.eq.s32.totalorder %s14, 1
      %p95 = scmp.ne.s32.totalorder %s90, %s92
      %p96 = scmp.eq.s32.totalorder %s14, 0
      %p97 = por %p95, %p96
      %p98 = scmp.ne.s32.totalorder %s90, %s92
      %p99 = scmp.eq.s32.totalorder %s19, 1
      %p100 = por %p98, %p99
      %p101 = scmp.ne.s32.totalorder %s92, %s93
      %p102 = scmp.eq.s32.totalorder %s19, 0
      %p103 = por %p101, %p102
      %p104 = scmp.ne.s32.totalorder %s92, %s93
      %p105 = scmp.eq.s32.totalorder %s20, 1
      %p106 = por %p104, %p105
      %p108 = scmp.ne.s32.totalorder %s93, %s107
      %p109 = scmp.eq.s32.totalorder %s20, 0
      %p110 = por %p108, %p109
      %s112 = sadd.s32 %s111, 1
      %p115 = scmp.eq.s32.totalorder %s14, 1
      %p116 = scmp.ne.s32.totalorder %s111, %s113
      %p117 = scmp.eq.s32.totalorder %s14, 0
      %p118 = por %p116, %p117
      %p119 = scmp.ne.s32.totalorder %s111, %s113
      %p120 = scmp.eq.s32.totalorder %s19, 1
      %p121 = por %p119, %p120
      %p122 = scmp.ne.s32.totalorder %s113, %s114
      %p123 = scmp.eq.s32.totalorder %s19, 0
      %p124 = por %p122, %p123
      %p125 = scmp.ne.s32.totalorder %s113, %s114
      %p126 = scmp.eq.s32.totalorder %s20, 1
      %p127 = por %p125, %p126
      %p129 = scmp.ne.s32.totalorder %s114, %s128
      %p130 = scmp.eq.s32.totalorder %s20, 0
      %p131 = por %p129, %p130
      %s132 = ssub.s32 %s14, %s21
      %p133 = scmp.eq.s32.totalorder %s132, 0
      %s135 = sadd.s32 %s134, 1
      %s136 = scalar_select %p133, %s134, %s135
      %p139 = pneg %p133
      %p140 = scmp.eq.s32.totalorder %s14, 1
      %p141 = por %p139, %p140
      %p142 = scmp.ne.s32.totalorder %s134, %s137
      %p143 = scmp.eq.s32.totalorder %s14, 0
      %p144 = por %p142, %p143
      %p145 = scmp.ne.s32.totalorder %s134, %s137
      %p146 = scmp.eq.s32.totalorder %s19, 1
      %p147 = por %p145, %p146
      %p148 = scmp.ne.s32.totalorder %s137, %s138
      %p149 = scmp.eq.s32.totalorder %s19, 0
      %p150 = por %p148, %p149
      %p151 = scmp.ne.s32.totalorder %s137, %s138
      %p152 = scmp.eq.s32.totalorder %s20, 1
      %p153 = por %p151, %p152
      %p155 = scmp.ne.s32.totalorder %s138, %s154
      %p156 = scmp.eq.s32.totalorder %s20, 0
      %p157 = por %p155, %p156
      %p158 = scmp.le.s32.totalorder 1, %s14
      %p159 = scmp.lt.s32.totalorder %s14, 3
      %p160 = pnand %p158, %p159
      %p161 = pneg %p160
      // Predicated region
      $region9: #{tpu_custom_call.1} parent=5 // pred_check
        _
      $region10: #{tpu_custom_call.1} parent=5 // pred_check_branch
        %163 = sbr.rel (%p160) target = $region12
      $region11: #{tpu_custom_call.1} parent=5 // pred_region
        %s164 = ssub.s32 %s14, 1
        // Predicated region
        $region13: #{tpu_custom_call.1} parent=11 // pred_check
          %p165 = pneg %p61
        $region14: #{tpu_custom_call.1} parent=11 // pred_check_branch
          %167 = sbr.rel (%p165) target = $region16
        $region15: #{tpu_custom_call.1} parent=11 // pred_region
          _
        $region16: #{tpu_custom_call.1} parent=11 // pred_fallthru
          _
        // Predicated region
        $region17: #{tpu_custom_call.1} parent=11 // pred_check
          %p168 = pneg %p82
        $region18: #{tpu_custom_call.1} parent=11 // pred_check_branch
          %170 = sbr.rel (%p168) target = $region20
        $region19: #{tpu_custom_call.1} parent=11 // pred_region
          _
        $region20: #{tpu_custom_call.1} parent=11 // pred_fallthru
          _
        // Predicated region
        $region21: #{tpu_custom_call.1} parent=11 // pred_check
          %p171 = pneg %p103
        $region22: #{tpu_custom_call.1} parent=11 // pred_check_branch
          %173 = sbr.rel (%p171) target = $region24
        $region23: #{tpu_custom_call.1} parent=11 // pred_region
          _
        $region24: #{tpu_custom_call.1} parent=11 // pred_fallthru
          _
        // Predicated region
        $region25: #{tpu_custom_call.1} parent=11 // pred_check
          %p174 = pneg %p124
        $region26: #{tpu_custom_call.1} parent=11 // pred_check_branch
          %176 = sbr.rel (%p174) target = $region28
        $region27: #{tpu_custom_call.1} parent=11 // pred_region
          _
        $region28: #{tpu_custom_call.1} parent=11 // pred_fallthru
          _
      $region12: #{tpu_custom_call.1} parent=5 // pred_fallthru
        _
      %p177 = scmp.lt.s32.totalorder %s14, 2
      // Predicated region
      $region29: #{tpu_custom_call.1} parent=5 // pred_check
        %p178 = pneg %p177
      $region30: #{tpu_custom_call.1} parent=5 // pred_check_branch
        %180 = sbr.rel (%p178) target = $region32
      $region31: #{tpu_custom_call.1} parent=5 // pred_region
        // Predicated region
        $region33: #{tpu_custom_call.1} parent=31 // pred_check
          %p181 = pneg %p34
        $region34: #{tpu_custom_call.1} parent=31 // pred_check_branch
          %183 = sbr.rel (%p181) target = $region36
        $region35: #{tpu_custom_call.1} parent=31 // pred_region
          %s184 = smul.u32 8, %s14
          %p185 = scmp.lt.s32.totalorder %s184, 15
          %s186 = scalar_select %p185, %s184, 15
          %s187 = scalar_lea.vmem %s0, %s186
          %s188 = smul.u32 8, %s14
        $region36: #{tpu_custom_call.1} parent=31 // pred_fallthru
          _
      $region32: #{tpu_custom_call.1} parent=5 // pred_fallthru
        _
      %p189 = scmp.le.s32.totalorder 1, %s14
      %p190 = scmp.lt.s32.totalorder %s14, 3
      %p191 = pnand %p189, %p190
      %p192 = pneg %p191
      // Predicated region
      $region37: #{tpu_custom_call.1} parent=5 // pred_check
        _
      $region38: #{tpu_custom_call.1} parent=5 // pred_check_branch
        %194 = sbr.rel (%p191) target = $region40
      $region39: #{tpu_custom_call.1} parent=5 // pred_region
        %s195 = ssub.s32 %s14, 1
        %s196 = smul.u32 8, %s19
        %p197 = scmp.lt.s32.totalorder %s196, 15
        %s198 = scalar_select %p197, %s196, 15
        %s199 = scalar_lea.vmem %s0, %s198
        %p200 = pneg %p40
        %p201 = pneg %p37
        %p202 = pneg %p61
        %p203 = pneg %p58
        %p204 = pneg %p82
        %p205 = pneg %p79
        %p206 = pneg %p103
        %p207 = pneg %p100
        %p208 = pneg %p124
        %p209 = pneg %p121
        %p210 = pneg %p150
        %p211 = pneg %p147
        %s212 = sand.u32 %s137, 1
        %s213 = scalar_lea.sflag [#allocation3], %s212
        %s214 = sand.u32 %s137, 1
        %s215 = smul.addr %s214, 32
        %s216 = scalar_lea.vmem [#allocation2], %s215
        %s217 = smul.u32 8, %s19
        %p218 = scmp.lt.s32.totalorder %s217, 15
        %s219 = scalar_select %p218, %s217, 15
        %s220 = scalar_lea.vmem %s0, %s219
        %s221 = smul.u32 8, %s19
        %s222 = smul.u32 8, %s19
        %v223 = vld [vmem:[%s220] sm:$0xff]
        %v224 = vld [vmem:[%s1] sm:$0xff]
        %226 = vset.pattern.permute.xlu0 0
        %227 = vperm.xlu0 %226, %v224
        %v228 = vpop.permute.xlu0 %227
        %v231 = vperm.slane %v223, 0
        %v232 = vperm.slane %v223, 1
        %v233 = vperm.slane %v223, 2
        %v234 = vperm.slane %v223, 3
        %v235 = vperm.slane %v223, 4
        %v236 = vperm.slane %v223, 5
        %v237 = vperm.slane %v223, 6
        %v238 = vperm.slane %v223, 7
        %v247 = vmul.f32 %v228, %v231
        %v248 = vmul.f32 %v228, %v232
        %v249 = vmul.f32 %v228, %v233
        %v250 = vmul.f32 %v228, %v234
        %v251 = vmul.f32 %v228, %v235
        %v252 = vmul.f32 %v228, %v236
        %v253 = vmul.f32 %v228, %v237
        %v254 = vmul.f32 %v228, %v238
        %v255 = vld [vmem:[%s2] sm:$0xff]
        %257 = vset.pattern.permute.xlu0 0
        %258 = vperm.xlu0 %257, %v255
        %v259 = vpop.permute.xlu0 %258
        %v261 = vadd.f32 %v247, %v259
        %v262 = vadd.f32 %v248, %v259
        %v263 = vadd.f32 %v249, %v259
        %v264 = vadd.f32 %v250, %v259
        %v265 = vadd.f32 %v251, %v259
        %v266 = vadd.f32 %v252, %v259
        %v267 = vadd.f32 %v253, %v259
        %v268 = vadd.f32 %v254, %v259
        %v269 = vmax.f32 %v261, 0.0
        %v270 = vmax.f32 %v262, 0.0
        %v271 = vmax.f32 %v263, 0.0
        %v272 = vmax.f32 %v264, 0.0
        %v273 = vmax.f32 %v265, 0.0
        %v274 = vmax.f32 %v266, 0.0
        %v275 = vmax.f32 %v267, 0.0
        %v276 = vmax.f32 %v268, 0.0
        %v277 = vld [vmem:[%s3] sm:$0xff]
        %vm278 = vcmask 64512
        %v280 = vsel %vm278, %v277, 0
        %282 = vmatpush.msra.mxu0 0.0
        %283 = vmatpush.msra.mxu0 0.0
        %284 = vmatpush.msra.mxu0 0.0
        %285 = vmatpush.msra.mxu0 0.0
        %286 = vmatpush.msra.mxu0 0.0
        %287 = vmatpush.msra.mxu0 0.0
        %288 = vmatpush.msra.mxu0 0.0
        %289 = vmatpush.msra.mxu0 0.0
        %290 = vmatpush.msra.mxu0 0.0
        %291 = vmatpush.msra.mxu0 0.0
        %292 = vmatpush.msra.mxu0 0.0
        %293 = vmatpush.msra.mxu0 0.0
        %294 = vmatpush.msra.mxu0 0.0
        %295 = vmatpush.msra.mxu0 0.0
        %296 = vmatpush.msra.mxu0 0.0
        %297 = vmatpush.msra.mxu0 %v269
        %298 = vmatmul.f32.gmra.mxu0 %v280
        %v299 = vpop.f32.mrf.mxu0
        %v300 = vadd.f32 0.0, %v299
        %301 = vdwg.mxu0
        %302 = vmatpush.msra.mxu0 0.0
        %303 = vmatpush.msra.mxu0 0.0
        %304 = vmatpush.msra.mxu0 0.0
        %305 = vmatpush.msra.mxu0 0.0
        %306 = vmatpush.msra.mxu0 0.0
        %307 = vmatpush.msra.mxu0 0.0
        %308 = vmatpush.msra.mxu0 0.0
        %309 = vmatpush.msra.mxu0 0.0
        %310 = vmatpush.msra.mxu0 0.0
        %311 = vmatpush.msra.mxu0 0.0
        %312 = vmatpush.msra.mxu0 0.0
        %313 = vmatpush.msra.mxu0 0.0
        %314 = vmatpush.msra.mxu0 0.0
        %315 = vmatpush.msra.mxu0 0.0
        %316 = vmatpush.msra.mxu0 0.0
        %317 = vmatpush.msra.mxu0 %v270
        %318 = vmatmul.f32.gmra.mxu0 %v280
        %v319 = vpop.f32.mrf.mxu0
        %v320 = vadd.f32 0.0, %v319
        %321 = vdwg.mxu0
        %322 = vmatpush.msra.mxu0 0.0
        %323 = vmatpush.msra.mxu0 0.0
        %324 = vmatpush.msra.mxu0 0.0
        %325 = vmatpush.msra.mxu0 0.0
        %326 = vmatpush.msra.mxu0 0.0
        %327 = vmatpush.msra.mxu0 0.0
        %328 = vmatpush.msra.mxu0 0.0
        %329 = vmatpush.msra.mxu0 0.0
        %330 = vmatpush.msra.mxu0 0.0
        %331 = vmatpush.msra.mxu0 0.0
        %332 = vmatpush.msra.mxu0 0.0
        %333 = vmatpush.msra.mxu0 0.0
        %334 = vmatpush.msra.mxu0 0.0
        %335 = vmatpush.msra.mxu0 0.0
        %336 = vmatpush.msra.mxu0 0.0
        %337 = vmatpush.msra.mxu0 %v271
        %338 = vmatmul.f32.gmra.mxu0 %v280
        %v339 = vpop.f32.mrf.mxu0
        %v340 = vadd.f32 0.0, %v339
        %341 = vdwg.mxu0
        %342 = vmatpush.msra.mxu0 0.0
        %343 = vmatpush.msra.mxu0 0.0
        %344 = vmatpush.msra.mxu0 0.0
        %345 = vmatpush.msra.mxu0 0.0
        %346 = vmatpush.msra.mxu0 0.0
        %347 = vmatpush.msra.mxu0 0.0
        %348 = vmatpush.msra.mxu0 0.0
        %349 = vmatpush.msra.mxu0 0.0
        %350 = vmatpush.msra.mxu0 0.0
        %351 = vmatpush.msra.mxu0 0.0
        %352 = vmatpush.msra.mxu0 0.0
        %353 = vmatpush.msra.mxu0 0.0
        %354 = vmatpush.msra.mxu0 0.0
        %355 = vmatpush.msra.mxu0 0.0
        %356 = vmatpush.msra.mxu0 0.0
        %357 = vmatpush.msra.mxu0 %v272
        %358 = vmatmul.f32.gmra.mxu0 %v280
        %v359 = vpop.f32.mrf.mxu0
        %v360 = vadd.f32 0.0, %v359
        %361 = vdwg.mxu0
        %362 = vmatpush.msra.mxu0 0.0
        %363 = vmatpush.msra.mxu0 0.0
        %364 = vmatpush.msra.mxu0 0.0
        %365 = vmatpush.msra.mxu0 0.0
        %366 = vmatpush.msra.mxu0 0.0
        %367 = vmatpush.msra.mxu0 0.0
        %368 = vmatpush.msra.mxu0 0.0
        %369 = vmatpush.msra.mxu0 0.0
        %370 = vmatpush.msra.mxu0 0.0
        %371 = vmatpush.msra.mxu0 0.0
        %372 = vmatpush.msra.mxu0 0.0
        %373 = vmatpush.msra.mxu0 0.0
        %374 = vmatpush.msra.mxu0 0.0
        %375 = vmatpush.msra.mxu0 0.0
        %376 = vmatpush.msra.mxu0 0.0
        %377 = vmatpush.msra.mxu0 %v273
        %378 = vmatmul.f32.gmra.mxu0 %v280
        %v379 = vpop.f32.mrf.mxu0
        %v380 = vadd.f32 0.0, %v379
        %381 = vdwg.mxu0
        %382 = vmatpush.msra.mxu0 0.0
        %383 = vmatpush.msra.mxu0 0.0
        %384 = vmatpush.msra.mxu0 0.0
        %385 = vmatpush.msra.mxu0 0.0
        %386 = vmatpush.msra.mxu0 0.0
        %387 = vmatpush.msra.mxu0 0.0
        %388 = vmatpush.msra.mxu0 0.0
        %389 = vmatpush.msra.mxu0 0.0
        %390 = vmatpush.msra.mxu0 0.0
        %391 = vmatpush.msra.mxu0 0.0
        %392 = vmatpush.msra.mxu0 0.0
        %393 = vmatpush.msra.mxu0 0.0
        %394 = vmatpush.msra.mxu0 0.0
        %395 = vmatpush.msra.mxu0 0.0
        %396 = vmatpush.msra.mxu0 0.0
        %397 = vmatpush.msra.mxu0 %v274
        %398 = vmatmul.f32.gmra.mxu0 %v280
        %v399 = vpop.f32.mrf.mxu0
        %v400 = vadd.f32 0.0, %v399
        %401 = vdwg.mxu0
        %402 = vmatpush.msra.mxu0 0.0
        %403 = vmatpush.msra.mxu0 0.0
        %404 = vmatpush.msra.mxu0 0.0
        %405 = vmatpush.msra.mxu0 0.0
        %406 = vmatpush.msra.mxu0 0.0
        %407 = vmatpush.msra.mxu0 0.0
        %408 = vmatpush.msra.mxu0 0.0
        %409 = vmatpush.msra.mxu0 0.0
        %410 = vmatpush.msra.mxu0 0.0
        %411 = vmatpush.msra.mxu0 0.0
        %412 = vmatpush.msra.mxu0 0.0
        %413 = vmatpush.msra.mxu0 0.0
        %414 = vmatpush.msra.mxu0 0.0
        %415 = vmatpush.msra.mxu0 0.0
        %416 = vmatpush.msra.mxu0 0.0
        %417 = vmatpush.msra.mxu0 %v275
        %418 = vmatmul.f32.gmra.mxu0 %v280
        %v419 = vpop.f32.mrf.mxu0
        %v420 = vadd.f32 0.0, %v419
        %421 = vdwg.mxu0
        %422 = vmatpush.msra.mxu0 0.0
        %423 = vmatpush.msra.mxu0 0.0
        %424 = vmatpush.msra.mxu0 0.0
        %425 = vmatpush.msra.mxu0 0.0
        %426 = vmatpush.msra.mxu0 0.0
        %427 = vmatpush.msra.mxu0 0.0
        %428 = vmatpush.msra.mxu0 0.0
        %429 = vmatpush.msra.mxu0 0.0
        %430 = vmatpush.msra.mxu0 0.0
        %431 = vmatpush.msra.mxu0 0.0
        %432 = vmatpush.msra.mxu0 0.0
        %433 = vmatpush.msra.mxu0 0.0
        %434 = vmatpush.msra.mxu0 0.0
        %435 = vmatpush.msra.mxu0 0.0
        %436 = vmatpush.msra.mxu0 0.0
        %437 = vmatpush.msra.mxu0 %v276
        %438 = vmatmul.f32.gmra.mxu0 %v280
        %v439 = vpop.f32.mrf.mxu0
        %v440 = vadd.f32 0.0, %v439
        %441 = vdwg.mxu0
        %v442 = vld [vmem:[%s4] sm:$0xff]
        %444 = vset.pattern.permute.xlu0 0
        %445 = vperm.xlu0 %444, %v442
        %v446 = vpop.permute.xlu0 %445
        %vm448 = vcmp.gt.f32.partialorder %v300, %v446
        %vm449 = vcmp.gt.f32.partialorder %v320, %v446
        %vm450 = vcmp.gt.f32.partialorder %v340, %v446
        %vm451 = vcmp.gt.f32.partialorder %v360, %v446
        %vm452 = vcmp.gt.f32.partialorder %v380, %v446
        %vm453 = vcmp.gt.f32.partialorder %v400, %v446
        %vm454 = vcmp.gt.f32.partialorder %v420, %v446
        %vm455 = vcmp.gt.f32.partialorder %v440, %v446
        %v456 = vsel %vm448, 1.0, 0.0
        %v457 = vsel %vm449, 1.0, 0.0
        %v458 = vsel %vm450, 1.0, 0.0
        %v459 = vsel %vm451, 1.0, 0.0
        %v460 = vsel %vm452, 1.0, 0.0
        %v461 = vsel %vm453, 1.0, 0.0
        %v462 = vsel %vm454, 1.0, 0.0
        %v463 = vsel %vm455, 1.0, 0.0
        %v464 = vpack.c.bf16 %v457, %v456
        %v465 = vpack.c.bf16 %v459, %v458
        %v466 = vpack.c.bf16 %v461, %v460
        %v467 = vpack.c.bf16 %v463, %v462
        %468 = vst [vmem:[%s216] sm:$0xff] %v464
        %469 = vst [vmem:[%s216 + $0x8] sm:$0xff] %v465
        %470 = vst [vmem:[%s216 + $0x10] sm:$0xff] %v466
        %471 = vst [vmem:[%s216 + $0x18] sm:$0xff] %v467
        %s472 = sand.u32 %s137, 1
        %s473 = scalar_lea.sflag [#allocation3], %s472
        %s474 = sand.u32 %s137, 1
        %s475 = smul.addr %s474, 32
        %s476 = scalar_lea.vmem [#allocation2], %s475
        // Predicated region
        $region41: #{tpu_custom_call.1} parent=39 // pred_check
          %p477 = pneg %p147
        $region42: #{tpu_custom_call.1} parent=39 // pred_check_branch
          %479 = sbr.rel (%p477) target = $region44
        $region43: #{tpu_custom_call.1} parent=39 // pred_region
          %s480 = smul.u32 8, %s19
          %482 = vsyncadd %s473, 0
          %s483 = smul.addr %s480, 4
          %s484 = scalar_lea.hbm %s5, %s483
          %s486 = sshll.u32 %s476, 4
          %s487 = int_to_ptr.vmem [resolvable:$true] %s486
          %s488 = sshll.u32 %s484, 4
          %s489 = int_to_ptr.hbm [resolvable:$true] %s488
          %491 = dma.vmem_to_hbm [thread:$0]  %s487, 512, %s489, %s473
        $region44: #{tpu_custom_call.1} parent=39 // pred_fallthru
          _
      $region40: #{tpu_custom_call.1} parent=5 // pred_fallthru
        _
      %p492 = scmp.le.s32.totalorder 2, %s14
      // Predicated region
      $region45: #{tpu_custom_call.1} parent=5 // pred_check
        %p493 = pneg %p492
      $region46: #{tpu_custom_call.1} parent=5 // pred_check_branch
        %495 = sbr.rel (%p493) target = $region48
      $region47: #{tpu_custom_call.1} parent=5 // pred_region
        %s496 = ssub.s32 %s14, 2
        // Predicated region
        $region49: #{tpu_custom_call.1} parent=47 // pred_check
          %p497 = pneg %p153
        $region50: #{tpu_custom_call.1} parent=47 // pred_check_branch
          %499 = sbr.rel (%p497) target = $region52
        $region51: #{tpu_custom_call.1} parent=47 // pred_region
          %s500 = sand.u32 %s138, 1
          %s501 = scalar_lea.sflag [#allocation3], %s500
          %s502 = sand.u32 %s138, 1
          %s503 = smul.addr %s502, 32
          %s504 = scalar_lea.vmem [#allocation2], %s503
          %506 = dma.done %s501, 512
        $region52: #{tpu_custom_call.1} parent=47 // pred_fallthru
          _
      $region48: #{tpu_custom_call.1} parent=5 // pred_fallthru
        _
    $region6: #{tpu_custom_call.1} parent=1 // loop_footer
      %s18 = sadd.s32 1, %s14
    $region7: #{tpu_custom_call.1} parent=1 // loop_footer_branch
      %13 = sbr.rel target = $region3
    $region8: #{tpu_custom_call.1} parent=1 // loop_exit
      _
    %507 = vsyncpa [#allocation3], 1
    %s508 = scalar_lea.sflag [#allocation3], 1
    %509 = vsyncpa %s508, 1

</llo_original>
